<compile_context>
chip_gen: v5e
topology: v5e:2x2
jax: 0.10.0
libtpu: 0.0.40
codegen_flags: <defaults>
</compile_context>

<pallas_src>
import jax
import jax.numpy as jnp
from jax.experimental import pallas as pl
from jax.experimental.pallas import tpu as pltpu

FC_DIM = 64
OUT_DIM = 10


def linear_kernel(x_ref, w_ref, b_ref, o_ref):
    # x_ref: (TB, FC_DIM) f32   -- batch tile, pipelined
    # w_ref: (FC_DIM, OUT_DIM) f32 -- VMEM-resident
    # b_ref: (1, OUT_DIM) f32      -- VMEM-resident
    # o_ref: (TB, OUT_DIM) f32
    y = jnp.dot(x_ref[...], w_ref[...], preferred_element_type=jnp.float32)
    o_ref[...] = y + b_ref[...]


def _round_up(n, m):
    return ((n + m - 1) // m) * m


def mlp_out_forward(x, w, b, *, tb=4096):
    """Pallas forward of MLP_OUT: y = x @ w.T + b.

    x: (B, FC_DIM) float32
    w: (OUT_DIM, FC_DIM) float32 -- PyTorch nn.Linear.weight layout
    b: (OUT_DIM,) float32
    Returns (B, OUT_DIM) float32.
    """
    B = x.shape[0]

    # Minimal batch padding: only up to a multiple of 8 (sublane granularity).
    B_pad = _round_up(B, 8)
    x_p = x if B_pad == B else jnp.pad(x, ((0, B_pad - B), (0, 0)))

    # Batch tile: multiple of 8, never larger than the (padded) batch.
    tb_eff = min(_round_up(tb, 8), B_pad)
    grid = (pl.cdiv(B_pad, tb_eff),)

    # Tiny parameters; transpose/reshape constant-fold under jit when static.
    w_t = w.T.astype(jnp.float32)            # (FC_DIM, OUT_DIM)
    b_2d = b.astype(jnp.float32).reshape(1, OUT_DIM)

    y = pl.pallas_call(
        linear_kernel,
        out_shape=jax.ShapeDtypeStruct((B_pad, OUT_DIM), jnp.float32),
        grid_spec=pltpu.PrefetchScalarGridSpec(
            num_scalar_prefetch=0,
            grid=grid,
            in_specs=[
                pl.BlockSpec((tb_eff, FC_DIM), lambda i: (i, 0)),    # x tile, pipelined
                pl.BlockSpec((FC_DIM, OUT_DIM), lambda i: (0, 0)),   # weight, resident
                pl.BlockSpec((1, OUT_DIM), lambda i: (0, 0)),        # bias, resident
            ],
            out_specs=pl.BlockSpec((tb_eff, OUT_DIM), lambda i: (i, 0)),
        ),
        compiler_params=pltpu.CompilerParams(
            dimension_semantics=("parallel",),  # shards batch tiles across TCs on v7x
        ),
    )(x_p, w_t, b_2d)

    return y if B_pad == B else y[:B]


if __name__ == "__main__":
    key = jax.random.PRNGKey(0)
    k_x, k_w, k_b = jax.random.split(key, 3)

    B = 8
    # Deterministic parameter init mirroring nn.Linear default:
    # U(-1/sqrt(fan_in), 1/sqrt(fan_in)) with fan_in = FC_DIM.
    bound = 1.0 / jnp.sqrt(jnp.float32(FC_DIM))
    w = jax.random.uniform(k_w, (OUT_DIM, FC_DIM), jnp.float32, -bound, bound)
    b = jax.random.uniform(k_b, (OUT_DIM,), jnp.float32, -bound, bound)
    x = jax.random.normal(k_x, (B, FC_DIM), jnp.float32)

    y = mlp_out_forward(x, w, b)
    y = jax.block_until_ready(y)

    # Sanity check against plain-JAX reference. f32 operands + f32 MXU
    # accumulation give near-f32 parity; tolerance covers any reduced-precision
    # matmul pass decomposition.
    y_ref = x @ w.T + b
    assert y.shape == (B, OUT_DIM)
    assert jnp.allclose(y, y_ref, atol=1e-2, rtol=1e-2), (
        float(jnp.max(jnp.abs(y - y_ref)))
    )

    print("KERNEL_OK")
</pallas_src>

<mosaic_0001>
module attributes {stable_mosaic.version = 11 : i64} {
  func.func @linear_kernel(%arg0: i32, %arg1: memref<8x64xf32, #tpu.memory_space<vmem>>, %arg2: memref<64x10xf32, #tpu.memory_space<vmem>>, %arg3: memref<1x10xf32, #tpu.memory_space<vmem>>, %arg4: memref<8x10xf32, #tpu.memory_space<vmem>>) attributes {dimension_semantics = [#tpu.dimension_semantics<parallel>], iteration_bounds = array<i64: 1>, scalar_prefetch = 0 : i64, scratch_operands = 0 : i64, tpu.core_type = #tpu.core_type<tc>, window_params = [{transform_indices = @transform_0, window_bounds = array<i64: 8, 64>}, {pipeline_mode = #tpu.pipeline_mode<synchronous>, transform_indices = @transform_1, window_bounds = array<i64: 64, 10>}, {pipeline_mode = #tpu.pipeline_mode<synchronous>, transform_indices = @transform_2, window_bounds = array<i64: 1, 10>}, {transform_indices = @transform_3, window_bounds = array<i64: 8, 10>}]} {
    %c0 = arith.constant 0 : index
    %c0_0 = arith.constant 0 : index
    %0 = vector.load %arg1[%c0, %c0_0] : memref<8x64xf32, #tpu.memory_space<vmem>>, vector<8x64xf32>
    %c0_1 = arith.constant 0 : index
    %c0_2 = arith.constant 0 : index
    %1 = vector.load %arg2[%c0_1, %c0_2] : memref<64x10xf32, #tpu.memory_space<vmem>>, vector<64x10xf32>
    %cst = arith.constant dense<0.000000e+00> : vector<8x10xf32>
    %2 = tpu.matmul %0, %1, %cst {dimension_numbers = #tpu.dot_dimension_numbers<[1], [0], [0], [1], [0, 0, 1, 1], [], []>} : vector<8x64xf32>, vector<64x10xf32>, vector<8x10xf32> -> vector<8x10xf32>
    %c0_3 = arith.constant 0 : index
    %c0_4 = arith.constant 0 : index
    %3 = vector.load %arg3[%c0_3, %c0_4] : memref<1x10xf32, #tpu.memory_space<vmem>>, vector<1x10xf32>
    %4 = vector.broadcast %3 : vector<1x10xf32> to vector<8x10xf32>
    %5 = arith.addf %2, %4 : vector<8x10xf32>
    %c0_5 = arith.constant 0 : index
    %c0_6 = arith.constant 0 : index
    %6 = vector.load %arg4[%c0_5, %c0_6] : memref<8x10xf32, #tpu.memory_space<vmem>>, vector<8x10xf32>
    tpu.vector_store %arg4[%c0_5, %c0_6], %5 {strides = array<i32>} : memref<8x10xf32, #tpu.memory_space<vmem>>, vector<8x10xf32>,
    return
  }
  func.func @transform_0(%arg0: i32) -> (i32, i32) {
    %c0_i32 = arith.constant 0 : i32
    %c0_i32_0 = arith.constant 0 : i32
    return %arg0, %c0_i32 : i32, i32
  }
  func.func @transform_1(%arg0: i32) -> (i32, i32) {
    %c0_i32 = arith.constant 0 : i32
    %c0_i32_0 = arith.constant 0 : i32
    %c0_i32_1 = arith.constant 0 : i32
    return %c0_i32, %c0_i32_0 : i32, i32
  }
  func.func @transform_2(%arg0: i32) -> (i32, i32) {
    %c0_i32 = arith.constant 0 : i32
    %c0_i32_0 = arith.constant 0 : i32
    %c0_i32_1 = arith.constant 0 : i32
    return %c0_i32, %c0_i32_0 : i32, i32
  }
  func.func @transform_3(%arg0: i32) -> (i32, i32) {
    %c0_i32 = arith.constant 0 : i32
    %c0_i32_0 = arith.constant 0 : i32
    return %arg0, %c0_i32 : i32, i32
  }
}

</mosaic_0001>

<llo_original>
// kernel: tpu_custom_call.1
$region0: #{tpu_custom_call.1}
  #allocation0 [shape = 'u32[]', space=smem, size = 0x4, offset = 0x4, fixed_abs, tag = 'smem constant byte address 0x4 - core index']
  #allocation1 [shape = 'u32[72,128]{1,0:T(1,128)}', space=vmem, size = 0x9000, scoped, tag = 'internal scratch']
  %s0 = inlined_call_operand.vmem [shape: f32[8,64], index: 0, kind: input, shape index: {}]
  %s1 = inlined_call_operand.vmem [shape: f32[64,10], index: 1, kind: input, shape index: {}]
  %s2 = inlined_call_operand.vmem [shape: f32[1,10], index: 2, kind: input, shape index: {}]
  %s3 = inlined_call_operand.hbm [shape: f32[8,10], index: 3, kind: output, shape index: {}]
  %s4 = sld [smem:[#allocation0]]
  $region22: #{tpu_custom_call.1} parent=0
    _
  %s6 = ssub.s32 1, %s4
  %s7 = scalar_select 0, %s6, %s4
  $region1: #{tpu_custom_call.1} parent=0
    #allocation2 [shape = 'u8[4096]{0}', space=vmem, size = 0x1000, scoped, tag = 'output window, operand 0, single buffered']
    #allocation3 [shape = 's32[1]{0}', space=sflag, size = 0x4, scoped, tag = 'scoped memory for tpu_custom_call.1']
    %8 = vsyncpa [#allocation3], 0
    // Predicated region
    $region2: #{tpu_custom_call.1} parent=1 // pred_check
      _
    $region3: #{tpu_custom_call.1} parent=1 // pred_check_branch
      %10 = sbr.rel (0) target = $region5
    $region4: #{tpu_custom_call.1} parent=1 // pred_region
      _
    $region5: #{tpu_custom_call.1} parent=1 // pred_fallthru
      _
    // Predicated region
    $region6: #{tpu_custom_call.1} parent=1 // pred_check
      _
    $region7: #{tpu_custom_call.1} parent=1 // pred_check_branch
      %12 = sbr.rel (0) target = $region9
    $region8: #{tpu_custom_call.1} parent=1 // pred_region
      _
    $region9: #{tpu_custom_call.1} parent=1 // pred_fallthru
      _
    // Predicated region
    $region10: #{tpu_custom_call.1} parent=1 // pred_check
      _
    $region11: #{tpu_custom_call.1} parent=1 // pred_check_branch
      %14 = sbr.rel (0) target = $region13
    $region12: #{tpu_custom_call.1} parent=1 // pred_region
      _
    $region13: #{tpu_custom_call.1} parent=1 // pred_fallthru
      _
    %v15 = vld [vmem:[%s0] sm:$0xff]
    %v16 = vld [vmem:[%s1] sm:$0xff]
    %v17 = vld [vmem:[%s1 + $0x8] sm:$0xff]
    %v18 = vld [vmem:[%s1 + $0x10] sm:$0xff]
    %v19 = vld [vmem:[%s1 + $0x18] sm:$0xff]
    %v20 = vld [vmem:[%s1 + $0x20] sm:$0xff]
    %v21 = vld [vmem:[%s1 + $0x28] sm:$0xff]
    %v22 = vld [vmem:[%s1 + $0x30] sm:$0xff]
    %v23 = vld [vmem:[%s1 + $0x38] sm:$0xff]
    %v24 = vld [vmem:[%s2] sm:$0x1]
    %v26 = vperm.slane %v24, 0
    %vm28 = vcmask 523264
    %v30 = vsel %vm28, %v15, 0
    %32 = vmatpush.msra.mxu0 0.0
    %33 = vmatpush.msra.mxu0 0.0
    %34 = vmatpush.msra.mxu0 0.0
    %35 = vmatpush.msra.mxu0 0.0
    %36 = vmatpush.msra.mxu0 0.0
    %37 = vmatpush.msra.mxu0 0.0
    %38 = vmatpush.msra.mxu0 0.0
    %39 = vmatpush.msra.mxu0 0.0
    %40 = vmatpush.msra.mxu0 %v23
    %41 = vmatpush.msra.mxu0 %v22
    %42 = vmatpush.msra.mxu0 %v21
    %43 = vmatpush.msra.mxu0 %v20
    %44 = vmatpush.msra.mxu0 %v19
    %45 = vmatpush.msra.mxu0 %v18
    %46 = vmatpush.msra.mxu0 %v17
    %47 = vmatpush.msra.mxu0 %v16
    %48 = vmatmul.f32.gmra.mxu0 %v30
    %v49 = vpop.f32.mrf.mxu0
    %v50 = vadd.f32 %v26, %v49
    %51 = vdwg.mxu0
    %vm52 = vcmask 80896
    %53 = vst.msk [vmem:[#allocation2] sm:$0xff] %vm52, %v50
    // Predicated region
    $region14: #{tpu_custom_call.1} parent=1 // pred_check
      _
    $region15: #{tpu_custom_call.1} parent=1 // pred_check_branch
      %55 = sbr.rel (0) target = $region17
    $region16: #{tpu_custom_call.1} parent=1 // pred_region
      %57 = vsyncadd [#allocation3], 0
      %s59 = sshll.u32 [#allocation2], 4
      %s60 = int_to_ptr.vmem [resolvable:$true] %s59
      %s61 = sshll.u32 %s3, 4
      %s62 = int_to_ptr.hbm [resolvable:$true] %s61
      %64 = dma.vmem_to_hbm [thread:$0]  %s60, 128, %s62, [#allocation3]
    $region17: #{tpu_custom_call.1} parent=1 // pred_fallthru
      _
    // Predicated region
    $region18: #{tpu_custom_call.1} parent=1 // pred_check
      _
    $region19: #{tpu_custom_call.1} parent=1 // pred_check_branch
      %66 = sbr.rel (0) target = $region21
    $region20: #{tpu_custom_call.1} parent=1 // pred_region
      %68 = dma.done [#allocation3], 128
    $region21: #{tpu_custom_call.1} parent=1 // pred_fallthru
      _
    %69 = vsyncpa [#allocation3], 1

</llo_original>
